<compile_context>
chip_gen: v6e
topology: v6e:2x2x1
jax: 0.10.0
libtpu: 0.0.40
codegen_flags: <defaults>
</compile_context>

<pallas_src>
import jax
import jax.numpy as jnp
from jax import lax
from jax.experimental import pallas as pl
from jax.experimental.pallas import tpu as pltpu


def _pick_images_per_step(n, cin):
    """Images folded into one grid step.

    Prefer filling all 8 f32 sublanes (nb*cin % 8 == 0) and amortising the
    per-step overhead, but never shrink the grid below 2 steps when n >= 2
    (keeps both v7x TensorCores busy) and cap the slab rows to keep vreg
    pressure low.
    """
    best = 1
    for nb in range(2, n + 1):
        if n % nb:
            continue
        if (nb * cin) % 8:          # only batch when it actually fills sublanes
            continue
        if n // nb < 2:             # keep >= 2 grid steps for v7x's 2 TCs
            continue
        if nb * cin > 32:           # cap live slab rows
            continue
        best = nb
    return best


def _build_tap_table(dw9, nb, H, W):
    """Fused (pad=1 edge mask) x (3x3 tap weight) table, shape (9, nb*Cin, H*W).

    Built once in the wrapper (plain XLA ops) and DMA'd once into VMEM via a
    constant index_map, so the kernel body does a single VPU multiply per tap.
    """
    cin = dw9.shape[0]
    hw = H * W
    p = jnp.arange(hw, dtype=jnp.int32)
    r = p // W
    c = p % W
    dw_rows = jnp.tile(dw9, (nb, 1))                       # (nb*cin, 9)
    taps = []
    for dr in (-1, 0, 1):
        for dc in (-1, 0, 1):
            tap = (dr + 1) * 3 + (dc + 1)
            valid = jnp.ones((hw,), jnp.float32)
            if dr == -1:
                valid = valid * (r >= 1).astype(jnp.float32)
            if dr == 1:
                valid = valid * (r <= H - 2).astype(jnp.float32)
            if dc == -1:
                valid = valid * (c >= 1).astype(jnp.float32)
            if dc == 1:
                valid = valid * (c <= W - 2).astype(jnp.float32)
            taps.append(valid[None, :] * dw_rows[:, tap][:, None])   # (nb*cin, hw)
    return jnp.stack(taps, axis=0)                          # (9, nb*cin, hw)


def _make_kernel(H, W, nb, cin, cout):
    hw = H * W

    def kernel(x_ref, mw_ref, pw_ref, o_ref):
        """One grid step = nb images.

        x_ref : (nb*cin, hw)  or (1, cin, hw)  input slab (lanes = flattened spatial)
        mw_ref: (9, nb*cin, hw)  fused edge-mask x depthwise-weight table
        pw_ref: (cout, cin)      pointwise 1x1 weights
        o_ref : (nb*cout, hw) or (1, cout, hw)  lane-dense output slab (NCHW order)
        """
        if len(x_ref.shape) == 3:                       # (1, cin, hw) block
            x = x_ref[0].astype(jnp.float32)            # (cin, hw)
        else:                                           # (nb*cin, hw) block
            x = x_ref[...].astype(jnp.float32)

        pwf = pw_ref[...].astype(jnp.float32)           # (cout, cin)

        # Depthwise 3x3, pad=1: 9 lane-rolled copies of the slab (XLU), each
        # multiplied by the fused mask*weight table (VPU), balanced-tree sum.
        row_partials = []
        for dr in (-1, 0, 1):
            terms = []
            for dc in (-1, 0, 1):
                tap = (dr + 1) * 3 + (dc + 1)
                off = dr * W + dc
                shifted = x if off == 0 else pltpu.roll(x, (-off) % hw, 1)
                terms.append(shifted * mw_ref[tap])
            row_partials.append((terms[0] + terms[1]) + terms[2])
        acc = (row_partials[0] + row_partials[1]) + row_partials[2]  # (nb*cin, hw)

        # Pointwise 1x1 on the VPU: per image group, cin broadcast-MAC outer
        # products producing a lane-dense (cout, hw) slab.
        outs = []
        for g in range(nb):
            base = g * cin
            out_g = pwf[:, 0:1] * acc[base:base + 1, :]
            for ci in range(1, cin):
                out_g = out_g + pwf[:, ci:ci + 1] * acc[base + ci:base + ci + 1, :]
            outs.append(out_g.astype(o_ref.dtype))

        if len(o_ref.shape) == 3:                       # (nb, cout, hw) block
            for g in range(nb):
                o_ref[g] = outs[g]
        else:                                           # (nb*cout, hw) block
            o_ref[...] = outs[0] if nb == 1 else jnp.concatenate(outs, axis=0)

    return kernel


def depthwise_separable_conv(x_nchw, dw_weight, pw_weight):
    """x_nchw: (N, Cin, H, W) float32
       dw_weight: (Cin, 1, 3, 3)   (PyTorch depthwise Conv2d weight, groups=Cin)
       pw_weight: (Cout, Cin, 1, 1)
       returns (N, Cout, H, W), matching nn.Conv2d semantics (no bias)."""
    N, Cin, H, W = x_nchw.shape
    Cout = pw_weight.shape[0]
    HW = H * W

    nb = _pick_images_per_step(N, Cin)
    steps = N // nb
    rows = nb * Cin

    dw9 = dw_weight.reshape(Cin, 9).astype(jnp.float32)
    pw = pw_weight.reshape(Cout, Cin).astype(jnp.float32)
    mw = _build_tap_table(dw9, nb, H, W)                 # (9, rows, HW)

    # Input layout: flat 2-D when the per-step row block is sublane-aligned
    # (or covers the full dim); otherwise 3-D blocks whose trailing dims equal
    # the full array dims (satisfies the (8,128) block constraint).
    flat_in = (rows % 8 == 0) or (rows == N * Cin)
    if flat_in:
        x_in = x_nchw.reshape(N * Cin, HW)
        in_x_spec = pl.BlockSpec((rows, HW), lambda n: (n, 0))
    else:
        x_in = x_nchw.reshape(N, Cin, HW)
        in_x_spec = pl.BlockSpec((nb, Cin, HW), lambda n: (n, 0, 0))

    out_rows = nb * Cout
    flat_out = (out_rows % 8 == 0) or (out_rows == N * Cout)
    if flat_out:
        out_shape = jax.ShapeDtypeStruct((N * Cout, HW), x_nchw.dtype)
        out_spec = pl.BlockSpec((out_rows, HW), lambda n: (n, 0))
    else:
        out_shape = jax.ShapeDtypeStruct((N, Cout, HW), x_nchw.dtype)
        out_spec = pl.BlockSpec((nb, Cout, HW), lambda n: (n, 0, 0))

    kernel = _make_kernel(H, W, nb, Cin, Cout)

    cost = pl.CostEstimate(
        flops=2 * N * HW * Cin * (9 + Cout),
        transcendentals=0,
        bytes_accessed=4 * (N * Cin * HW + 9 * rows * HW + Cout * Cin
                            + N * Cout * HW),
    )

    out = pl.pallas_call(
        kernel,
        out_shape=out_shape,
        grid_spec=pltpu.PrefetchScalarGridSpec(
            num_scalar_prefetch=0,
            grid=(steps,),
            in_specs=[
                in_x_spec,
                pl.BlockSpec((9, rows, HW), lambda n: (0, 0, 0)),
                pl.BlockSpec((Cout, Cin), lambda n: (0, 0)),
            ],
            out_specs=out_spec,
        ),
        compiler_params=pltpu.CompilerParams(
            dimension_semantics=("parallel",),
        ),
        cost_estimate=cost,
    )(x_in, mw, pw)

    # Trailing/leading-dim splits only: free, stays in NCHW order.
    return out.reshape(N, Cout, H, W)


def _reference(x_nchw, dw_weight, pw_weight):
    """Pure-JAX reference (same semantics as the PyTorch module)."""
    y = lax.conv_general_dilated(
        x_nchw, dw_weight, window_strides=(1, 1), padding=((1, 1), (1, 1)),
        dimension_numbers=("NCHW", "OIHW", "NCHW"),
        feature_group_count=x_nchw.shape[1])
    z = lax.conv_general_dilated(
        y, pw_weight, window_strides=(1, 1), padding=((0, 0), (0, 0)),
        dimension_numbers=("NCHW", "OIHW", "NCHW"))
    return z


if __name__ == "__main__":
    # Small deterministic problem: batch=2, ch_in=4, ch_out=8, spatial=16x16
    N, CH_IN, CH_OUT, H, W = 2, 4, 8, 16, 16

    key = jax.random.PRNGKey(0)
    kx, kdw, kpw = jax.random.split(key, 3)

    x = jax.random.normal(kx, (N, CH_IN, H, W), dtype=jnp.float32)
    # Deterministic "init" of the module's parameters (shapes from __init__):
    #   depth_conv.weight: (ch_in, 1, 3, 3), point_conv.weight: (ch_out, ch_in, 1, 1)
    dw_weight = jax.random.normal(kdw, (CH_IN, 1, 3, 3), dtype=jnp.float32) * 0.1
    pw_weight = jax.random.normal(kpw, (CH_OUT, CH_IN, 1, 1), dtype=jnp.float32) * 0.1

    out = depthwise_separable_conv(x, dw_weight, pw_weight)
    out = jax.block_until_ready(out)

    ref = jax.block_until_ready(_reference(x, dw_weight, pw_weight))
    assert out.shape == (N, CH_OUT, H, W), out.shape
    assert jnp.allclose(out, ref, atol=1e-4, rtol=1e-4), "mismatch vs reference"

    print("KERNEL_OK")
</pallas_src>

<mosaic_0001>
module attributes {stable_mosaic.version = 11 : i64} {
  func.func @kernel(%arg0: i32, %arg1: memref<1x4x256xf32, #tpu.memory_space<vmem>>, %arg2: memref<9x4x256xf32, #tpu.memory_space<vmem>>, %arg3: memref<8x4xf32, #tpu.memory_space<vmem>>, %arg4: memref<8x256xf32, #tpu.memory_space<vmem>>) attributes {dimension_semantics = [#tpu.dimension_semantics<parallel>], iteration_bounds = array<i64: 2>, scalar_prefetch = 0 : i64, scratch_operands = 0 : i64, tpu.core_type = #tpu.core_type<tc>, window_params = [{transform_indices = @transform_0, window_bounds = array<i64: 1, 4, 256>}, {pipeline_mode = #tpu.pipeline_mode<synchronous>, transform_indices = @transform_1, window_bounds = array<i64: 9, 4, 256>}, {pipeline_mode = #tpu.pipeline_mode<synchronous>, transform_indices = @transform_2, window_bounds = array<i64: 8, 4>}, {transform_indices = @transform_3, window_bounds = array<i64: 8, 256>}]} {
    %c0 = arith.constant 0 : index
    %c0_0 = arith.constant 0 : index
    %c0_1 = arith.constant 0 : index
    %0 = vector.load %arg1[%c0, %c0_0, %c0_1] : memref<1x4x256xf32, #tpu.memory_space<vmem>>, vector<1x4x256xf32>
    %1 = vector.shape_cast %0 : vector<1x4x256xf32> to vector<4x256xf32>
    %c0_2 = arith.constant 0 : index
    %c0_3 = arith.constant 0 : index
    %2 = vector.load %arg3[%c0_2, %c0_3] : memref<8x4xf32, #tpu.memory_space<vmem>>, vector<8x4xf32>
    %c17_i32 = arith.constant 17 : i32
    %3 = tpu.dynamic_rotate %1 by %c17_i32 dim 1 : vector<4x256xf32>, i32 -> vector<4x256xf32>
    %c0_4 = arith.constant 0 : index
    %c0_5 = arith.constant 0 : index
    %c0_6 = arith.constant 0 : index
    %4 = vector.load %arg2[%c0_4, %c0_5, %c0_6] : memref<9x4x256xf32, #tpu.memory_space<vmem>>, vector<1x4x256xf32>
    %5 = vector.shape_cast %4 : vector<1x4x256xf32> to vector<4x256xf32>
    %6 = arith.mulf %3, %5 : vector<4x256xf32>
    %c16_i32 = arith.constant 16 : i32
    %7 = tpu.dynamic_rotate %1 by %c16_i32 dim 1 : vector<4x256xf32>, i32 -> vector<4x256xf32>
    %c1 = arith.constant 1 : index
    %c0_7 = arith.constant 0 : index
    %c0_8 = arith.constant 0 : index
    %8 = vector.load %arg2[%c1, %c0_7, %c0_8] : memref<9x4x256xf32, #tpu.memory_space<vmem>>, vector<1x4x256xf32>
    %9 = vector.shape_cast %8 : vector<1x4x256xf32> to vector<4x256xf32>
    %10 = arith.mulf %7, %9 : vector<4x256xf32>
    %c15_i32 = arith.constant 15 : i32
    %11 = tpu.dynamic_rotate %1 by %c15_i32 dim 1 : vector<4x256xf32>, i32 -> vector<4x256xf32>
    %c2 = arith.constant 2 : index
    %c0_9 = arith.constant 0 : index
    %c0_10 = arith.constant 0 : index
    %12 = vector.load %arg2[%c2, %c0_9, %c0_10] : memref<9x4x256xf32, #tpu.memory_space<vmem>>, vector<1x4x256xf32>
    %13 = vector.shape_cast %12 : vector<1x4x256xf32> to vector<4x256xf32>
    %14 = arith.mulf %11, %13 : vector<4x256xf32>
    %15 = arith.addf %6, %10 : vector<4x256xf32>
    %16 = arith.addf %15, %14 : vector<4x256xf32>
    %c1_i32 = arith.constant 1 : i32
    %17 = tpu.dynamic_rotate %1 by %c1_i32 dim 1 : vector<4x256xf32>, i32 -> vector<4x256xf32>
    %c3 = arith.constant 3 : index
    %c0_11 = arith.constant 0 : index
    %c0_12 = arith.constant 0 : index
    %18 = vector.load %arg2[%c3, %c0_11, %c0_12] : memref<9x4x256xf32, #tpu.memory_space<vmem>>, vector<1x4x256xf32>
    %19 = vector.shape_cast %18 : vector<1x4x256xf32> to vector<4x256xf32>
    %20 = arith.mulf %17, %19 : vector<4x256xf32>
    %c4 = arith.constant 4 : index
    %c0_13 = arith.constant 0 : index
    %c0_14 = arith.constant 0 : index
    %21 = vector.load %arg2[%c4, %c0_13, %c0_14] : memref<9x4x256xf32, #tpu.memory_space<vmem>>, vector<1x4x256xf32>
    %22 = vector.shape_cast %21 : vector<1x4x256xf32> to vector<4x256xf32>
    %23 = arith.mulf %1, %22 : vector<4x256xf32>
    %c255_i32 = arith.constant 255 : i32
    %24 = tpu.dynamic_rotate %1 by %c255_i32 dim 1 : vector<4x256xf32>, i32 -> vector<4x256xf32>
    %c5 = arith.constant 5 : index
    %c0_15 = arith.constant 0 : index
    %c0_16 = arith.constant 0 : index
    %25 = vector.load %arg2[%c5, %c0_15, %c0_16] : memref<9x4x256xf32, #tpu.memory_space<vmem>>, vector<1x4x256xf32>
    %26 = vector.shape_cast %25 : vector<1x4x256xf32> to vector<4x256xf32>
    %27 = arith.mulf %24, %26 : vector<4x256xf32>
    %28 = arith.addf %20, %23 : vector<4x256xf32>
    %29 = arith.addf %28, %27 : vector<4x256xf32>
    %c241_i32 = arith.constant 241 : i32
    %30 = tpu.dynamic_rotate %1 by %c241_i32 dim 1 : vector<4x256xf32>, i32 -> vector<4x256xf32>
    %c6 = arith.constant 6 : index
    %c0_17 = arith.constant 0 : index
    %c0_18 = arith.constant 0 : index
    %31 = vector.load %arg2[%c6, %c0_17, %c0_18] : memref<9x4x256xf32, #tpu.memory_space<vmem>>, vector<1x4x256xf32>
    %32 = vector.shape_cast %31 : vector<1x4x256xf32> to vector<4x256xf32>
    %33 = arith.mulf %30, %32 : vector<4x256xf32>
    %c240_i32 = arith.constant 240 : i32
    %34 = tpu.dynamic_rotate %1 by %c240_i32 dim 1 : vector<4x256xf32>, i32 -> vector<4x256xf32>
    %c7 = arith.constant 7 : index
    %c0_19 = arith.constant 0 : index
    %c0_20 = arith.constant 0 : index
    %35 = vector.load %arg2[%c7, %c0_19, %c0_20] : memref<9x4x256xf32, #tpu.memory_space<vmem>>, vector<1x4x256xf32>
    %36 = vector.shape_cast %35 : vector<1x4x256xf32> to vector<4x256xf32>
    %37 = arith.mulf %34, %36 : vector<4x256xf32>
    %c239_i32 = arith.constant 239 : i32
    %38 = tpu.dynamic_rotate %1 by %c239_i32 dim 1 : vector<4x256xf32>, i32 -> vector<4x256xf32>
    %c8 = arith.constant 8 : index
    %c0_21 = arith.constant 0 : index
    %c0_22 = arith.constant 0 : index
    %39 = vector.load %arg2[%c8, %c0_21, %c0_22] : memref<9x4x256xf32, #tpu.memory_space<vmem>>, vector<1x4x256xf32>
    %40 = vector.shape_cast %39 : vector<1x4x256xf32> to vector<4x256xf32>
    %41 = arith.mulf %38, %40 : vector<4x256xf32>
    %42 = arith.addf %33, %37 : vector<4x256xf32>
    %43 = arith.addf %42, %41 : vector<4x256xf32>
    %44 = arith.addf %16, %29 : vector<4x256xf32>
    %45 = arith.addf %44, %43 : vector<4x256xf32>
    %46 = vector.extract_strided_slice %2 {offsets = [0, 0], sizes = [8, 1], strides = [1, 1]} : vector<8x4xf32> to vector<8x1xf32>
    %47 = vector.extract_strided_slice %45 {offsets = [0, 0], sizes = [1, 256], strides = [1, 1]} : vector<4x256xf32> to vector<1x256xf32>
    %48 = vector.broadcast %46 : vector<8x1xf32> to vector<8x256xf32>
    %49 = vector.broadcast %47 : vector<1x256xf32> to vector<8x256xf32>
    %50 = arith.mulf %48, %49 : vector<8x256xf32>
    %51 = vector.extract_strided_slice %2 {offsets = [0, 1], sizes = [8, 1], strides = [1, 1]} : vector<8x4xf32> to vector<8x1xf32>
    %52 = vector.extract_strided_slice %45 {offsets = [1, 0], sizes = [1, 256], strides = [1, 1]} : vector<4x256xf32> to vector<1x256xf32>
    %53 = vector.broadcast %51 : vector<8x1xf32> to vector<8x256xf32>
    %54 = vector.broadcast %52 : vector<1x256xf32> to vector<8x256xf32>
    %55 = arith.mulf %53, %54 : vector<8x256xf32>
    %56 = arith.addf %50, %55 : vector<8x256xf32>
    %57 = vector.extract_strided_slice %2 {offsets = [0, 2], sizes = [8, 1], strides = [1, 1]} : vector<8x4xf32> to vector<8x1xf32>
    %58 = vector.extract_strided_slice %45 {offsets = [2, 0], sizes = [1, 256], strides = [1, 1]} : vector<4x256xf32> to vector<1x256xf32>
    %59 = vector.broadcast %57 : vector<8x1xf32> to vector<8x256xf32>
    %60 = vector.broadcast %58 : vector<1x256xf32> to vector<8x256xf32>
    %61 = arith.mulf %59, %60 : vector<8x256xf32>
    %62 = arith.addf %56, %61 : vector<8x256xf32>
    %63 = vector.extract_strided_slice %2 {offsets = [0, 3], sizes = [8, 1], strides = [1, 1]} : vector<8x4xf32> to vector<8x1xf32>
    %64 = vector.extract_strided_slice %45 {offsets = [3, 0], sizes = [1, 256], strides = [1, 1]} : vector<4x256xf32> to vector<1x256xf32>
    %65 = vector.broadcast %63 : vector<8x1xf32> to vector<8x256xf32>
    %66 = vector.broadcast %64 : vector<1x256xf32> to vector<8x256xf32>
    %67 = arith.mulf %65, %66 : vector<8x256xf32>
    %68 = arith.addf %62, %67 : vector<8x256xf32>
    %c0_23 = arith.constant 0 : index
    %c0_24 = arith.constant 0 : index
    %69 = vector.load %arg4[%c0_23, %c0_24] : memref<8x256xf32, #tpu.memory_space<vmem>>, vector<8x256xf32>
    tpu.vector_store %arg4[%c0_23, %c0_24], %68 {strides = array<i32>} : memref<8x256xf32, #tpu.memory_space<vmem>>, vector<8x256xf32>,
    return
  }
  func.func @transform_0(%arg0: i32) -> (i32, i32, i32) {
    %c0_i32 = arith.constant 0 : i32
    %c0_i32_0 = arith.constant 0 : i32
    %c0_i32_1 = arith.constant 0 : i32
    return %arg0, %c0_i32, %c0_i32_0 : i32, i32, i32
  }
  func.func @transform_1(%arg0: i32) -> (i32, i32, i32) {
    %c0_i32 = arith.constant 0 : i32
    %c0_i32_0 = arith.constant 0 : i32
    %c0_i32_1 = arith.constant 0 : i32
    %c0_i32_2 = arith.constant 0 : i32
    return %c0_i32, %c0_i32_0, %c0_i32_1 : i32, i32, i32
  }
  func.func @transform_2(%arg0: i32) -> (i32, i32) {
    %c0_i32 = arith.constant 0 : i32
    %c0_i32_0 = arith.constant 0 : i32
    %c0_i32_1 = arith.constant 0 : i32
    return %c0_i32, %c0_i32_0 : i32, i32
  }
  func.func @transform_3(%arg0: i32) -> (i32, i32) {
    %c0_i32 = arith.constant 0 : i32
    %c0_i32_0 = arith.constant 0 : i32
    return %arg0, %c0_i32 : i32, i32
  }
}

</mosaic_0001>

<llo_original>
// kernel: tpu_custom_call.1
$region0: #{tpu_custom_call.1}
  #allocation0 [shape = 'u32[]', space=smem, size = 0x4, offset = 0x4, fixed_abs, tag = 'smem constant byte address 0x4 - core index']
  #allocation1 [shape = 'u32[144,128]{1,0:T(1,128)}', space=vmem, size = 0x12000, scoped, tag = 'internal scratch']
  %s0 = inlined_call_operand.hbm [shape: f32[2,4,256], index: 0, kind: input, shape index: {}]
  %s1 = inlined_call_operand.hbm [shape: f32[9,4,256], index: 1, kind: input, shape index: {}]
  %s2 = inlined_call_operand.vmem [shape: f32[8,4], index: 2, kind: input, shape index: {}]
  %s3 = inlined_call_operand.hbm [shape: f32[16,256], index: 3, kind: output, shape index: {}]
  %s4 = sld [smem:[#allocation0]]
  $region53: #{tpu_custom_call.1} parent=0
    _
  %s6 = ssub.s32 1, %s4
  %s7 = scalar_select 0, %s6, %s4
  $region1: #{tpu_custom_call.1} parent=0
    #allocation2 [shape = 'u8[8192]{0}', space=vmem, size = 0x2000, scoped, tag = 'input window, operand 0']
    #allocation3 [shape = 's32[2]{0}', space=sflag, size = 0x8, scoped, tag = 'scoped memory for tpu_custom_call.1']
    #allocation4 [shape = 's32[2]{0}', space=sflag, size = 0x8, scoped, tag = 'scoped memory for tpu_custom_call.1']
    #allocation5 [shape = 'u8[36864]{0}', space=vmem, size = 0x9000, scoped, tag = 'input window, operand 1, single buffered']
    #allocation6 [shape = 's32[1]{0}', space=sflag, size = 0x4, scoped, tag = 'scoped memory for tpu_custom_call.1']
    #allocation7 [shape = 'u8[16384]{0}', space=vmem, size = 0x4000, scoped, tag = 'output window, operand 0']
    %8 = vsyncpa [#allocation3], 0
    %s9 = scalar_lea.sflag [#allocation3], 1
    %10 = vsyncpa %s9, 0
    %11 = vsyncpa [#allocation6], 0
    %12 = vsyncpa [#allocation4], 0
    %s13 = scalar_lea.sflag [#allocation4], 1
    %14 = vsyncpa %s13, 0
    loop: start=0, step=1, limit=4
    $region2: #{tpu_custom_call.1} parent=1 // loop_pre_header
      _
    $region3: #{tpu_custom_call.1} parent=1 // loop_header
      %s16 = sphi 0, %s20
      %p17 = scmp.ge.s32.totalorder %s16, 4
      %s26 = sphi 0, %s28
      %s29 = sphi 0, %s26
      %s30 = sphi 0, %s29
      %s46 = sphi 0, %s30
      %s50 = sphi 0, %s50
      %s52 = sphi 0, %s50
      %s53 = sphi 0, %s52
      %s67 = sphi 0, %s53
      %s71 = sphi 0, %s71
      %s73 = sphi 0, %s71
      %s74 = sphi 0, %s73
      %s88 = sphi 0, %s74
      %s94 = sphi 0, %s96
      %s97 = sphi 0, %s94
      %s98 = sphi 0, %s97
      %s114 = sphi 0, %s98
    $region4: #{tpu_custom_call.1} parent=1 // loop_header_branch
      %19 = sbr.rel (%p17) target = $region8
    $region5: #{tpu_custom_call.1} parent=1 // loop_body
      %s21 = ssub.s32 %s16, 1
      %s22 = ssub.s32 %s16, 2
      %s23 = sadd.s32 %s16, 1
      %s24 = ssub.s32 %s16, %s23
      %p25 = scmp.eq.s32.totalorder %s24, 0
      %s27 = sadd.s32 %s26, 1
      %s28 = scalar_select %p25, %s26, %s27
      %p31 = pneg %p25
      %p32 = scmp.eq.s32.totalorder %s16, 1
      %p33 = por %p31, %p32
      %p34 = scmp.ne.s32.totalorder %s26, %s29
      %p35 = scmp.eq.s32.totalorder %s16, 0
      %p36 = por %p34, %p35
      %p37 = scmp.ne.s32.totalorder %s26, %s29
      %p38 = scmp.eq.s32.totalorder %s21, 1
      %p39 = por %p37, %p38
      %p40 = scmp.ne.s32.totalorder %s29, %s30
      %p41 = scmp.eq.s32.totalorder %s21, 0
      %p42 = por %p40, %p41
      %p43 = scmp.ne.s32.totalorder %s29, %s30
      %p44 = scmp.eq.s32.totalorder %s22, 1
      %p45 = por %p43, %p44
      %p47 = scmp.ne.s32.totalorder %s30, %s46
      %p48 = scmp.eq.s32.totalorder %s22, 0
      %p49 = por %p47, %p48
      %s51 = sadd.s32 %s50, 1
      %p54 = scmp.eq.s32.totalorder %s16, 1
      %p55 = scmp.ne.s32.totalorder %s50, %s52
      %p56 = scmp.eq.s32.totalorder %s16, 0
      %p57 = por %p55, %p56
      %p58 = scmp.ne.s32.totalorder %s50, %s52
      %p59 = scmp.eq.s32.totalorder %s21, 1
      %p60 = por %p58, %p59
      %p61 = scmp.ne.s32.totalorder %s52, %s53
      %p62 = scmp.eq.s32.totalorder %s21, 0
      %p63 = por %p61, %p62
      %p64 = scmp.ne.s32.totalorder %s52, %s53
      %p65 = scmp.eq.s32.totalorder %s22, 1
      %p66 = por %p64, %p65
      %p68 = scmp.ne.s32.totalorder %s53, %s67
      %p69 = scmp.eq.s32.totalorder %s22, 0
      %p70 = por %p68, %p69
      %s72 = sadd.s32 %s71, 1
      %p75 = scmp.eq.s32.totalorder %s16, 1
      %p76 = scmp.ne.s32.totalorder %s71, %s73
      %p77 = scmp.eq.s32.totalorder %s16, 0
      %p78 = por %p76, %p77
      %p79 = scmp.ne.s32.totalorder %s71, %s73
      %p80 = scmp.eq.s32.totalorder %s21, 1
      %p81 = por %p79, %p80
      %p82 = scmp.ne.s32.totalorder %s73, %s74
      %p83 = scmp.eq.s32.totalorder %s21, 0
      %p84 = por %p82, %p83
      %p85 = scmp.ne.s32.totalorder %s73, %s74
      %p86 = scmp.eq.s32.totalorder %s22, 1
      %p87 = por %p85, %p86
      %p89 = scmp.ne.s32.totalorder %s74, %s88
      %p90 = scmp.eq.s32.totalorder %s22, 0
      %p91 = por %p89, %p90
      %s92 = ssub.s32 %s16, %s23
      %p93 = scmp.eq.s32.totalorder %s92, 0
      %s95 = sadd.s32 %s94, 1
      %s96 = scalar_select %p93, %s94, %s95
      %p99 = pneg %p93
      %p100 = scmp.eq.s32.totalorder %s16, 1
      %p101 = por %p99, %p100
      %p102 = scmp.ne.s32.totalorder %s94, %s97
      %p103 = scmp.eq.s32.totalorder %s16, 0
      %p104 = por %p102, %p103
      %p105 = scmp.ne.s32.totalorder %s94, %s97
      %p106 = scmp.eq.s32.totalorder %s21, 1
      %p107 = por %p105, %p106
      %p108 = scmp.ne.s32.totalorder %s97, %s98
      %p109 = scmp.eq.s32.totalorder %s21, 0
      %p110 = por %p108, %p109
      %p111 = scmp.ne.s32.totalorder %s97, %s98
      %p112 = scmp.eq.s32.totalorder %s22, 1
      %p113 = por %p111, %p112
      %p115 = scmp.ne.s32.totalorder %s98, %s114
      %p116 = scmp.eq.s32.totalorder %s22, 0
      %p117 = por %p115, %p116
      %p118 = scmp.le.s32.totalorder 1, %s16
      %p119 = scmp.lt.s32.totalorder %s16, 3
      %p120 = pnand %p118, %p119
      %p121 = pneg %p120
      // Predicated region
      $region9: #{tpu_custom_call.1} parent=5 // pred_check
        _
      $region10: #{tpu_custom_call.1} parent=5 // pred_check_branch
        %123 = sbr.rel (%p120) target = $region12
      $region11: #{tpu_custom_call.1} parent=5 // pred_region
        %s124 = ssub.s32 %s16, 1
        // Predicated region
        $region13: #{tpu_custom_call.1} parent=11 // pred_check
          %p125 = pneg %p63
        $region14: #{tpu_custom_call.1} parent=11 // pred_check_branch
          %127 = sbr.rel (%p125) target = $region16
        $region15: #{tpu_custom_call.1} parent=11 // pred_region
          %s129 = ssub.s32 1152, 1152
          %130 = vsyncadd [#allocation6], %s129
          %s131 = sshll.u32 [#allocation5], 4
          %s132 = int_to_ptr.vmem [resolvable:$true] %s131
          %137 = dma.hbm_to_vmem [thread:$0]  %s1, 1152, %s132, [#allocation6], 128, 128, 8
        $region16: #{tpu_custom_call.1} parent=11 // pred_fallthru
          _
        // Predicated region
        $region17: #{tpu_custom_call.1} parent=11 // pred_check
          %p138 = pneg %p84
        $region18: #{tpu_custom_call.1} parent=11 // pred_check_branch
          %140 = sbr.rel (%p138) target = $region20
        $region19: #{tpu_custom_call.1} parent=11 // pred_region
          _
        $region20: #{tpu_custom_call.1} parent=11 // pred_fallthru
          _
      $region12: #{tpu_custom_call.1} parent=5 // pred_fallthru
        _
      %p141 = scmp.lt.s32.totalorder %s16, 2
      // Predicated region
      $region21: #{tpu_custom_call.1} parent=5 // pred_check
        %p142 = pneg %p141
      $region22: #{tpu_custom_call.1} parent=5 // pred_check_branch
        %144 = sbr.rel (%p142) target = $region24
      $region23: #{tpu_custom_call.1} parent=5 // pred_region
        // Predicated region
        $region25: #{tpu_custom_call.1} parent=23 // pred_check
          %p145 = pneg %p36
        $region26: #{tpu_custom_call.1} parent=23 // pred_check_branch
          %147 = sbr.rel (%p145) target = $region28
        $region27: #{tpu_custom_call.1} parent=23 // pred_region
          %s148 = sand.u32 %s26, 1
          %s149 = scalar_lea.sflag [#allocation3], %s148
          %s150 = sand.u32 %s26, 1
          %s151 = smul.addr %s150, 8
          %s152 = scalar_lea.vmem [#allocation2], %s151
          %s154 = ssub.s32 128, 128
          %155 = vsyncadd %s149, %s154
          %s156 = smul.addr %s16, 2
          %s157 = smul.addr %s156, 64
          %s158 = scalar_lea.hbm %s0, %s157
          %s160 = sshll.u32 %s152, 4
          %s161 = int_to_ptr.vmem [resolvable:$true] %s160
          %163 = dma.hbm_to_vmem [thread:$0]  %s158, 128, %s161, %s149
        $region28: #{tpu_custom_call.1} parent=23 // pred_fallthru
          _
      $region24: #{tpu_custom_call.1} parent=5 // pred_fallthru
        _
      %p164 = scmp.le.s32.totalorder 1, %s16
      %p165 = scmp.lt.s32.totalorder %s16, 3
      %p166 = pnand %p164, %p165
      %p167 = pneg %p166
      // Predicated region
      $region29: #{tpu_custom_call.1} parent=5 // pred_check
        _
      $region30: #{tpu_custom_call.1} parent=5 // pred_check_branch
        %169 = sbr.rel (%p166) target = $region32
      $region31: #{tpu_custom_call.1} parent=5 // pred_region
        %s170 = ssub.s32 %s16, 1
        %s171 = sand.u32 %s29, 1
        %s172 = scalar_lea.sflag [#allocation3], %s171
        %s173 = sand.u32 %s29, 1
        %s174 = smul.addr %s173, 8
        %s175 = scalar_lea.vmem [#allocation2], %s174
        // Predicated region
        $region33: #{tpu_custom_call.1} parent=31 // pred_check
          %p176 = pneg %p42
        $region34: #{tpu_custom_call.1} parent=31 // pred_check_branch
          %178 = sbr.rel (%p176) target = $region36
        $region35: #{tpu_custom_call.1} parent=31 // pred_region
          %179 = dma.done %s172, 128
        $region36: #{tpu_custom_call.1} parent=31 // pred_fallthru
          _
        // Predicated region
        $region37: #{tpu_custom_call.1} parent=31 // pred_check
          %p180 = pneg %p63
        $region38: #{tpu_custom_call.1} parent=31 // pred_check_branch
          %182 = sbr.rel (%p180) target = $region40
        $region39: #{tpu_custom_call.1} parent=31 // pred_region
          %183 = dma.done [#allocation6], 1152
        $region40: #{tpu_custom_call.1} parent=31 // pred_fallthru
          _
        %s184 = sand.u32 %s29, 1
        %s185 = scalar_lea.sflag [#allocation3], %s184
        %s186 = sand.u32 %s29, 1
        %s187 = smul.addr %s186, 8
        %s188 = scalar_lea.vmem [#allocation2], %s187
        %p189 = pneg %p42
        %p190 = pneg %p39
        %p191 = pneg %p63
        %p192 = pneg %p60
        %p193 = pneg %p84
        %p194 = pneg %p81
        %p195 = pneg %p110
        %p196 = pneg %p107
        %s197 = sand.u32 %s97, 1
        %s198 = scalar_lea.sflag [#allocation4], %s197
        %s199 = sand.u32 %s97, 1
        %s200 = smul.addr %s199, 16
        %s201 = scalar_lea.vmem [#allocation7], %s200
        %v202 = vld [vmem:[%s175] sm:$0xff]
        %v203 = vld [vmem:[%s2] sm:$0xff]
        %v205 = vcombine.high %v202, %v202
        %207 = vrot.lane.b32.xlu0 %v202, 17
        %v208 = vpop.permute.xlu0 %207
        %209 = vrot.lane.b32.xlu0 %v205, 17
        %v210 = vpop.permute.xlu0 %209
        %v211 = vlaneseq
        %v212 = vand.u32 %v211, 127
        %vm213 = vcmp.lt.s32.totalorder %v212, 17
        %v214 = vsel %vm213, %v208, %v210
        %v215 = vsel %vm213, %v210, %v208
        %v216 = vld [vmem:[#allocation5] sm:$0xff]
        %v218 = vcombine.high %v216, %v216
        %v220 = vmul.f32 %v215, %v216
        %v221 = vmul.f32 %v214, %v218
        %222 = vrot.lane.b32.xlu0 %v202, 16
        %v223 = vpop.permute.xlu0 %222
        %224 = vrot.lane.b32.xlu0 %v205, 16
        %v225 = vpop.permute.xlu0 %224
        %vm226 = vcmp.lt.s32.totalorder %v212, 16
        %v227 = vsel %vm226, %v223, %v225
        %v228 = vsel %vm226, %v225, %v223
        %s229 = scalar_lea.vmem [#allocation5], 8
        %v230 = vld [vmem:[%s229] sm:$0xff]
        %v232 = vcombine.high %v230, %v230
        %v234 = vmul.f32 %v228, %v230
        %v235 = vmul.f32 %v227, %v232
        %236 = vrot.lane.b32.xlu0 %v202, 15
        %v237 = vpop.permute.xlu0 %236
        %238 = vrot.lane.b32.xlu0 %v205, 15
        %v239 = vpop.permute.xlu0 %238
        %vm240 = vcmp.lt.s32.totalorder %v212, 15
        %v241 = vsel %vm240, %v237, %v239
        %v242 = vsel %vm240, %v239, %v237
        %s243 = scalar_lea.vmem [#allocation5], 16
        %v244 = vld [vmem:[%s243] sm:$0xff]
        %v246 = vcombine.high %v244, %v244
        %v248 = vmul.f32 %v242, %v244
        %v249 = vmul.f32 %v241, %v246
        %v250 = vadd.f32 %v220, %v234
        %v251 = vadd.f32 %v221, %v235
        %v252 = vadd.f32 %v250, %v248
        %v253 = vadd.f32 %v251, %v249
        %254 = vrot.lane.b32.xlu0 %v202, 1
        %v255 = vpop.permute.xlu0 %254
        %256 = vrot.lane.b32.xlu0 %v205, 1
        %v257 = vpop.permute.xlu0 %256
        %vm258 = vcmp.lt.s32.totalorder %v212, 1
        %v259 = vsel %vm258, %v255, %v257
        %v260 = vsel %vm258, %v257, %v255
        %s261 = scalar_lea.vmem [#allocation5], 24
        %v262 = vld [vmem:[%s261] sm:$0xff]
        %v264 = vcombine.high %v262, %v262
        %v266 = vmul.f32 %v260, %v262
        %v267 = vmul.f32 %v259, %v264
        %s268 = scalar_lea.vmem [#allocation5], 32
        %v269 = vld [vmem:[%s268] sm:$0xff]
        %v270 = vmul.f32 %v202, %v269
        %271 = vrot.lane.b32.xlu0 %v202, 127
        %v272 = vpop.permute.xlu0 %271
        %273 = vrot.lane.b32.xlu0 %v205, 127
        %v274 = vpop.permute.xlu0 %273
        %vm275 = vcmp.lt.s32.totalorder %v212, 127
        %v276 = vsel %vm275, %v272, %v274
        %v277 = vsel %vm275, %v274, %v272
        %s278 = scalar_lea.vmem [#allocation5], 40
        %v279 = vld [vmem:[%s278] sm:$0xff]
        %v281 = vcombine.high %v279, %v279
        %v283 = vmul.f32 %v276, %v279
        %v284 = vmul.f32 %v277, %v281
        %v286 = vcombine.high %v270, %v270
        %v288 = vadd.f32 %v266, %v270
        %v289 = vadd.f32 %v267, %v286
        %v290 = vadd.f32 %v288, %v283
        %v291 = vadd.f32 %v289, %v284
        %292 = vrot.lane.b32.xlu0 %v202, 113
        %v293 = vpop.permute.xlu0 %292
        %294 = vrot.lane.b32.xlu0 %v205, 113
        %v295 = vpop.permute.xlu0 %294
        %vm296 = vcmp.lt.s32.totalorder %v212, 113
        %v297 = vsel %vm296, %v293, %v295
        %v298 = vsel %vm296, %v295, %v293
        %s299 = scalar_lea.vmem [#allocation5], 48
        %v300 = vld [vmem:[%s299] sm:$0xff]
        %v302 = vcombine.high %v300, %v300
        %v304 = vmul.f32 %v297, %v300
        %v305 = vmul.f32 %v298, %v302
        %306 = vrot.lane.b32.xlu0 %v202, 112
        %v307 = vpop.permute.xlu0 %306
        %308 = vrot.lane.b32.xlu0 %v205, 112
        %v309 = vpop.permute.xlu0 %308
        %vm310 = vcmp.lt.s32.totalorder %v212, 112
        %v311 = vsel %vm310, %v307, %v309
        %v312 = vsel %vm310, %v309, %v307
        %s313 = scalar_lea.vmem [#allocation5], 56
        %v314 = vld [vmem:[%s313] sm:$0xff]
        %v316 = vcombine.high %v314, %v314
        %v318 = vmul.f32 %v311, %v314
        %v319 = vmul.f32 %v312, %v316
        %320 = vrot.lane.b32.xlu0 %v202, 111
        %v321 = vpop.permute.xlu0 %320
        %322 = vrot.lane.b32.xlu0 %v205, 111
        %v323 = vpop.permute.xlu0 %322
        %vm324 = vcmp.lt.s32.totalorder %v212, 111
        %v325 = vsel %vm324, %v321, %v323
        %v326 = vsel %vm324, %v323, %v321
        %s327 = scalar_lea.vmem [#allocation5], 64
        %v328 = vld [vmem:[%s327] sm:$0xff]
        %v330 = vcombine.high %v328, %v328
        %v332 = vmul.f32 %v325, %v328
        %v333 = vmul.f32 %v326, %v330
        %v334 = vadd.f32 %v304, %v318
        %v335 = vadd.f32 %v305, %v319
        %v336 = vadd.f32 %v334, %v332
        %v337 = vadd.f32 %v335, %v333
        %v338 = vadd.f32 %v252, %v290
        %v339 = vadd.f32 %v253, %v291
        %v340 = vadd.f32 %v338, %v336
        %v341 = vadd.f32 %v339, %v337
        %343 = vset.pattern.permute.xlu0 0
        %344 = vperm.xlu0 %343, %v203
        %v345 = vpop.permute.xlu0 %344
        %v347 = vlaneseq
        %v348 = vshrl.u32 %v347, 7
        %v349 = vsub.s32 0, %v348
        %v350 = vrot.slane %v340, %v349
        %v351 = vlaneseq
        %v352 = vshrl.u32 %v351, 7
        %v353 = vsub.s32 0, %v352
        %v354 = vrot.slane %v341, %v353
        %v355 = vmul.f32 %v345, %v350
        %v356 = vmul.f32 %v345, %v354
        %357 = vset.pattern.permute.xlu0 1
        %358 = vperm.xlu0 %357, %v203
        %v359 = vpop.permute.xlu0 %358
        %v361 = vlaneseq
        %v362 = vshrl.u32 %v361, 7
        %v363 = vsub.s32 1, %v362
        %v364 = vrot.slane %v340, %v363
        %v365 = vlaneseq
        %v366 = vshrl.u32 %v365, 7
        %v367 = vsub.s32 1, %v366
        %v368 = vrot.slane %v341, %v367
        %v369 = vmul.f32 %v359, %v364
        %v370 = vmul.f32 %v359, %v368
        %v371 = vadd.f32 %v355, %v369
        %v372 = vadd.f32 %v356, %v370
        %373 = vset.pattern.permute.xlu0 2
        %374 = vperm.xlu0 %373, %v203
        %v375 = vpop.permute.xlu0 %374
        %v377 = vlaneseq
        %v378 = vshrl.u32 %v377, 7
        %v379 = vsub.s32 2, %v378
        %v380 = vrot.slane %v340, %v379
        %v381 = vlaneseq
        %v382 = vshrl.u32 %v381, 7
        %v383 = vsub.s32 2, %v382
        %v384 = vrot.slane %v341, %v383
        %v385 = vmul.f32 %v375, %v380
        %v386 = vmul.f32 %v375, %v384
        %v387 = vadd.f32 %v371, %v385
        %v388 = vadd.f32 %v372, %v386
        %389 = vset.pattern.permute.xlu0 3
        %390 = vperm.xlu0 %389, %v203
        %v391 = vpop.permute.xlu0 %390
        %v393 = vlaneseq
        %v394 = vshrl.u32 %v393, 7
        %v395 = vsub.s32 3, %v394
        %v396 = vrot.slane %v340, %v395
        %v397 = vlaneseq
        %v398 = vshrl.u32 %v397, 7
        %v399 = vsub.s32 3, %v398
        %v400 = vrot.slane %v341, %v399
        %v401 = vmul.f32 %v391, %v396
        %v402 = vmul.f32 %v391, %v400
        %v403 = vadd.f32 %v387, %v401
        %v404 = vadd.f32 %v388, %v402
        %405 = vst [vmem:[%s201] sm:$0xff] %v403
        %406 = vst [vmem:[%s201 + $0x8] sm:$0xff] %v404
        %s407 = sand.u32 %s97, 1
        %s408 = scalar_lea.sflag [#allocation4], %s407
        %s409 = sand.u32 %s97, 1
        %s410 = smul.addr %s409, 16
        %s411 = scalar_lea.vmem [#allocation7], %s410
        // Predicated region
        $region41: #{tpu_custom_call.1} parent=31 // pred_check
          %p412 = pneg %p107
        $region42: #{tpu_custom_call.1} parent=31 // pred_check_branch
          %414 = sbr.rel (%p412) target = $region44
        $region43: #{tpu_custom_call.1} parent=31 // pred_region
          %s416 = ssub.s32 256, 256
          %417 = vsyncadd %s408, %s416
          %s418 = smul.addr %s21, 2
          %s419 = smul.addr %s418, 128
          %s420 = scalar_lea.hbm %s3, %s419
          %s422 = sshll.u32 %s411, 4
          %s423 = int_to_ptr.vmem [resolvable:$true] %s422
          %425 = dma.vmem_to_hbm [thread:$0]  %s423, 256, %s420, %s408
        $region44: #{tpu_custom_call.1} parent=31 // pred_fallthru
          _
      $region32: #{tpu_custom_call.1} parent=5 // pred_fallthru
        _
      %p426 = scmp.le.s32.totalorder 2, %s16
      // Predicated region
      $region45: #{tpu_custom_call.1} parent=5 // pred_check
        %p427 = pneg %p426
      $region46: #{tpu_custom_call.1} parent=5 // pred_check_branch
        %429 = sbr.rel (%p427) target = $region48
      $region47: #{tpu_custom_call.1} parent=5 // pred_region
        %s430 = ssub.s32 %s16, 2
        // Predicated region
        $region49: #{tpu_custom_call.1} parent=47 // pred_check
          %p431 = pneg %p113
        $region50: #{tpu_custom_call.1} parent=47 // pred_check_branch
          %433 = sbr.rel (%p431) target = $region52
        $region51: #{tpu_custom_call.1} parent=47 // pred_region
          %s434 = sand.u32 %s98, 1
          %s435 = scalar_lea.sflag [#allocation4], %s434
          %s436 = sand.u32 %s98, 1
          %s437 = smul.addr %s436, 16
          %s438 = scalar_lea.vmem [#allocation7], %s437
          %439 = dma.done %s435, 256
        $region52: #{tpu_custom_call.1} parent=47 // pred_fallthru
          _
      $region48: #{tpu_custom_call.1} parent=5 // pred_fallthru
        _
    $region6: #{tpu_custom_call.1} parent=1 // loop_footer
      %s20 = sadd.s32 1, %s16
    $region7: #{tpu_custom_call.1} parent=1 // loop_footer_branch
      %15 = sbr.rel target = $region3
    $region8: #{tpu_custom_call.1} parent=1 // loop_exit
      _
    %440 = vsyncpa [#allocation3], 1
    %s441 = scalar_lea.sflag [#allocation3], 1
    %442 = vsyncpa %s441, 1
    %443 = vsyncpa [#allocation6], 1
    %444 = vsyncpa [#allocation4], 1
    %s445 = scalar_lea.sflag [#allocation4], 1
    %446 = vsyncpa %s445, 1

</llo_original>
